<compile_context>
chip_gen: v7x
topology: tpu7x:2x2x1
jax: 0.10.0
libtpu: 0.0.40
codegen_flags: <defaults>
</compile_context>

<pallas_src>
import jax
import jax.numpy as jnp
from jax import lax
from jax.experimental import pallas as pl
from jax.experimental.pallas import tpu as pltpu


# --------------------------- kernel bodies -----------------------------------
def _logits_2d(x_ref, we_ref, be_ref, wc_ref, bc_ref):
    """Encoder stand-in (dense+tanh) + token classifier on flattened rows.

    bf16 operands (MXU-native), float32 accumulation, lane-dense 2-D matmuls.
    """
    x = x_ref[...].astype(jnp.bfloat16)                                  # (B*S, H)
    we = we_ref[...].astype(jnp.bfloat16)                                # (H, H)
    h = jnp.tanh(jnp.dot(x, we, preferred_element_type=jnp.float32) + be_ref[...])
    wc = wc_ref[...].astype(jnp.bfloat16)                                # (H, L)
    return jnp.dot(h.astype(jnp.bfloat16), wc,
                   preferred_element_type=jnp.float32) + bc_ref[...]     # (B*S, L) f32


def enc_cls_kernel(x_ref, we_ref, be_ref, wc_ref, bc_ref, logits_ref):
    # labels=None path: logits only.
    logits_ref[...] = _logits_2d(x_ref, we_ref, be_ref, wc_ref, bc_ref)


def fused_enc_cls_crf_kernel(x_ref, we_ref, be_ref, wc_ref, bc_ref,
                             ohw_ref, numpath_ref, mask_ref,
                             start_ref, end_ref, trans_ref,
                             logits_ref, loss_ref, em_sc):
    """Fused encoder/classifier + CRF mean log-likelihood.

    numpath_ref holds the gold-path start/transition/end score (precomputed in
    the wrapper with XLA gathers); ohw_ref is the mask-weighted one-hot of the
    gold tags, so the numerator needs only one multiply-reduce in-kernel.
    """
    B, T, L = em_sc.shape
    S = x_ref.shape[0] // B

    # ---- classifier logits over all S tokens (no mid-kernel [:,1:-1,:] slice) ----
    logits_ref[...] = _logits_2d(x_ref, we_ref, be_ref, wc_ref, bc_ref)

    # Gather per-batch emission windows [1 : 1+T] ([CLS]/[SEP] dropped) into a
    # (B, T, L) VMEM scratch via ref loads; avoids an unaligned register
    # relayout/reshape of the (B*S, L) matmul output.
    for b in range(B):                              # B is small and static
        em_sc[b] = logits_ref[pl.ds(b * S + 1, T), :]
    em = em_sc[...]                                                      # (B, T, L)

    mask = mask_ref[...]          # (B, T) f32; contiguous prefix, mask[:,0]==1
    start = start_ref[...]        # (1, L)
    end = end_ref[...]            # (1, L)
    trans = trans_ref[...]        # (L, L)

    # ---- numerator: emission score at the gold tags (rest is precomputed) ----
    em_gold = jnp.sum(jnp.sum(em * ohw_ref[...], axis=2), axis=1, keepdims=True)  # (B,1)
    num = numpath_ref[...] + em_gold                                     # (B, 1)

    # ---- denominator: forward algorithm (only the loop-carried recursion) ----
    den = start + em[:, 0, :]                                            # (B, L)
    # static unroll: T < 16 here; switch to lax.fori_loop for longer sequences.
    for t in range(1, T):
        m_t = mask[:, t:t + 1]                                           # (B, 1)
        bcast = den[:, :, None] + trans[None, :, :] + em[:, t, None, :]  # (B, L, L)
        mx = jnp.max(bcast, axis=1, keepdims=True)                       # (B, 1, L)
        nxt = jnp.log(jnp.sum(jnp.exp(bcast - mx), axis=1)) + mx[:, 0, :]  # (B, L)
        den = jnp.where(m_t > 0.0, nxt, den)

    den = den + end
    mx = jnp.max(den, axis=-1, keepdims=True)
    den_lse = jnp.log(jnp.sum(jnp.exp(den - mx), axis=-1, keepdims=True)) + mx  # (B,1)

    llh = num - den_lse                                                  # (B, 1)
    loss_ref[...] = jnp.sum(llh, axis=0, keepdims=True) / float(B)       # (1,1) mean llh


# --------------------------- wrappers -----------------------------------------
def _full_spec(shape):
    nd = len(shape)
    return pl.BlockSpec(shape, lambda *_, _nd=nd: (0,) * _nd)


_COMPILER_PARAMS = pltpu.CompilerParams(dimension_semantics=("arbitrary",))
# TODO(synk): at BERT-scale shapes (H=768, S=512, larger B) the encoder matmuls
# should be gridded over B*S row tiles (128-512 rows) marked ("parallel", ...)
# so v7x's 2 TensorCores are used, with tiles re-derived for its 64 MiB VMEM;
# at these toy shapes everything fits in one block so grid=(1,) is kept.


def classifier_logits_2d(x2d, we, be, wc, bc):
    BS, _H = x2d.shape
    L = wc.shape[1]
    return pl.pallas_call(
        enc_cls_kernel,
        out_shape=jax.ShapeDtypeStruct((BS, L), jnp.float32),
        grid=(1,),
        in_specs=[_full_spec(x2d.shape), _full_spec(we.shape), _full_spec(be.shape),
                  _full_spec(wc.shape), _full_spec(bc.shape)],
        out_specs=_full_spec((BS, L)),
        compiler_params=_COMPILER_PARAMS,
    )(x2d, we, be, wc, bc)


def fused_logits_and_crf(x2d, we, be, wc, bc, onehot_w, num_path, maskf,
                         start2d, end2d, trans):
    BS, _H = x2d.shape
    L = wc.shape[1]
    B, T, _ = onehot_w.shape
    logits2d, llh = pl.pallas_call(
        fused_enc_cls_crf_kernel,
        out_shape=(jax.ShapeDtypeStruct((BS, L), jnp.float32),
                   jax.ShapeDtypeStruct((1, 1), jnp.float32)),
        grid=(1,),
        in_specs=[_full_spec(x2d.shape), _full_spec(we.shape), _full_spec(be.shape),
                  _full_spec(wc.shape), _full_spec(bc.shape),
                  _full_spec(onehot_w.shape), _full_spec(num_path.shape),
                  _full_spec(maskf.shape), _full_spec(start2d.shape),
                  _full_spec(end2d.shape), _full_spec(trans.shape)],
        out_specs=(_full_spec((BS, L)), _full_spec((1, 1))),
        scratch_shapes=[pltpu.VMEM((B, T, L), jnp.float32)],
        compiler_params=_COMPILER_PARAMS,
    )(x2d, we, be, wc, bc, onehot_w, num_path, maskf, start2d, end2d, trans)
    return logits2d, llh[0, 0]


def model_crf_forward(params, input_ids, token_type_ids=None, attention_mask=None,
                      labels=None, crf_mask=None):
    B, S = input_ids.shape
    H = params["word_emb"].shape[1]
    L = params["w_cls"].shape[1]
    T = S - 2
    if token_type_ids is None:
        token_type_ids = jnp.zeros_like(input_ids)

    # glue: BERT-style input embedding lookup (word + position + segment);
    # dropout is identity in eval mode.
    x = (params["word_emb"][input_ids]
         + params["pos_emb"][None, :S, :]
         + params["type_emb"][token_type_ids])
    x2d = x.reshape(B * S, H)  # flatten rows -> lane-dense 2-D MXU matmuls

    if labels is None:
        logits2d = classifier_logits_2d(x2d, params["w_enc"], params["b_enc"],
                                        params["w_cls"], params["b_cls"])
        logits = logits2d.reshape(B, S, L)[:, 1:-1, :]   # slice is free in XLA
        return (logits,)

    if crf_mask is None:
        crf_mask = jnp.ones((B, T), jnp.int32)
    # precondition (torchcrf semantics): crf_mask[:,0]==1 and masks are
    # contiguous prefixes.
    labels = labels.astype(jnp.int32)
    maskf = crf_mask.astype(jnp.float32)
    start = params["crf_start"]
    end = params["crf_end"]
    trans = params["crf_trans"]

    # ---- gold-path start/transition/end score: O(B*T) XLA gathers (hoisted) ----
    seq_end = jnp.sum(crf_mask.astype(jnp.int32), axis=1) - 1            # (B,)
    last_tags = labels[jnp.arange(B), seq_end]
    num_path = (start[labels[:, 0]]
                + jnp.sum(trans[labels[:, :-1], labels[:, 1:]] * maskf[:, 1:], axis=1)
                + end[last_tags])[:, None]                               # (B, 1)
    mask_eff = maskf.at[:, 0].set(1.0)                                   # t=0 always counted
    onehot_w = jax.nn.one_hot(labels, L, dtype=jnp.float32) * mask_eff[:, :, None]

    logits2d, llh_mean = fused_logits_and_crf(
        x2d, params["w_enc"], params["b_enc"], params["w_cls"], params["b_cls"],
        onehot_w, num_path, maskf,
        start.reshape(1, L), end.reshape(1, L), trans)
    logits = logits2d.reshape(B, S, L)[:, 1:-1, :]
    return (-1.0 * llh_mean, logits)


# --------------------- pure-JAX references (correctness check) ----------------
def ref_logits_2d(x2d, we, be, wc, bc):
    # same bf16-operand / f32-accumulate math as the kernel
    h = jnp.tanh(jnp.dot(x2d.astype(jnp.bfloat16), we.astype(jnp.bfloat16),
                         preferred_element_type=jnp.float32) + be)
    return jnp.dot(h.astype(jnp.bfloat16), wc.astype(jnp.bfloat16),
                   preferred_element_type=jnp.float32) + bc


def ref_crf_llh_mean(em, tags, mask, start, end, trans):
    B, T, L = em.shape
    maskf = mask.astype(jnp.float32)
    barange = jnp.arange(B)
    num = start[tags[:, 0]] + em[barange, 0, tags[:, 0]]
    den = start[None, :] + em[:, 0, :]
    for t in range(1, T):
        num = num + (trans[tags[:, t - 1], tags[:, t]]
                     + em[barange, t, tags[:, t]]) * maskf[:, t]
        nxt = jax.scipy.special.logsumexp(
            den[:, :, None] + trans[None] + em[:, t, None, :], axis=1)
        den = jnp.where(maskf[:, t][:, None] > 0, nxt, den)
    seq_end = jnp.sum(mask.astype(jnp.int32), axis=1) - 1
    last_tags = tags[barange, seq_end]
    num = num + end[last_tags]
    den_lse = jax.scipy.special.logsumexp(den + end[None, :], axis=1)
    return jnp.mean(num - den_lse)


if __name__ == "__main__":
    B, S, H, L, V = 2, 10, 32, 8, 50   # batch, seq (incl. CLS/SEP), hidden, label_size, vocab
    T = S - 2
    key = jax.random.PRNGKey(0)
    ks = jax.random.split(key, 12)
    params = {
        "word_emb": 0.1 * jax.random.normal(ks[0], (V, H), jnp.float32),
        "pos_emb":  0.1 * jax.random.normal(ks[1], (S, H), jnp.float32),
        "type_emb": 0.1 * jax.random.normal(ks[2], (2, H), jnp.float32),
        "w_enc":    0.1 * jax.random.normal(ks[3], (H, H), jnp.float32),
        "b_enc":    0.1 * jax.random.normal(ks[4], (1, H), jnp.float32),
        "w_cls":    0.1 * jax.random.normal(ks[5], (H, L), jnp.float32),
        "b_cls":    0.1 * jax.random.normal(ks[6], (1, L), jnp.float32),
        "crf_start": 0.1 * jax.random.normal(ks[7], (L,), jnp.float32),
        "crf_end":   0.1 * jax.random.normal(ks[8], (L,), jnp.float32),
        "crf_trans": 0.1 * jax.random.normal(ks[9], (L, L), jnp.float32),
    }

    input_ids = jax.random.randint(ks[10], (B, S), 0, V)
    token_type_ids = jnp.zeros((B, S), jnp.int32)
    attention_mask = jnp.ones((B, S), jnp.int32)
    labels = jax.random.randint(ks[11], (B, T), 0, L)
    lengths = jnp.array([T, T - 2], jnp.int32)
    crf_mask = (jnp.arange(T)[None, :] < lengths[:, None]).astype(jnp.int32)  # first col all 1

    # labels path (fused kernel) and logits-only path
    neg_llh, logits = model_crf_forward(params, input_ids, token_type_ids,
                                        attention_mask, labels=labels, crf_mask=crf_mask)
    (logits_nl,) = model_crf_forward(params, input_ids, token_type_ids, attention_mask)
    jax.block_until_ready((neg_llh, logits, logits_nl))

    # correctness checks against pure-JAX references
    x = (params["word_emb"][input_ids] + params["pos_emb"][None, :S, :]
         + params["type_emb"][token_type_ids])
    logits_r = ref_logits_2d(x.reshape(B * S, H), params["w_enc"], params["b_enc"],
                             params["w_cls"], params["b_cls"]).reshape(B, S, L)[:, 1:-1, :]
    llh_r = ref_crf_llh_mean(logits, labels, crf_mask, params["crf_start"],
                             params["crf_end"], params["crf_trans"])
    assert jnp.allclose(logits, logits_r, rtol=1e-2, atol=1e-3), "logits mismatch"
    assert jnp.allclose(logits_nl, logits, rtol=1e-5, atol=1e-5), "labels/no-labels logits mismatch"
    assert jnp.allclose(neg_llh, -llh_r, rtol=1e-4, atol=1e-4), "CRF loss mismatch"

    print("KERNEL_OK")
</pallas_src>

<mosaic_0001>
module attributes {stable_mosaic.version = 11 : i64} {
  func.func @fused_enc_cls_crf_kernel(%arg0: i32, %arg1: memref<20x32xf32, #tpu.memory_space<vmem>>, %arg2: memref<32x32xf32, #tpu.memory_space<vmem>>, %arg3: memref<1x32xf32, #tpu.memory_space<vmem>>, %arg4: memref<32x8xf32, #tpu.memory_space<vmem>>, %arg5: memref<1x8xf32, #tpu.memory_space<vmem>>, %arg6: memref<2x8x8xf32, #tpu.memory_space<vmem>>, %arg7: memref<2x1xf32, #tpu.memory_space<vmem>>, %arg8: memref<2x8xf32, #tpu.memory_space<vmem>>, %arg9: memref<1x8xf32, #tpu.memory_space<vmem>>, %arg10: memref<1x8xf32, #tpu.memory_space<vmem>>, %arg11: memref<8x8xf32, #tpu.memory_space<vmem>>, %arg12: memref<20x8xf32, #tpu.memory_space<vmem>>, %arg13: memref<1x1xf32, #tpu.memory_space<vmem>>, %arg14: memref<2x8x8xf32, #tpu.memory_space<vmem>>) attributes {dimension_semantics = [#tpu.dimension_semantics<arbitrary>], iteration_bounds = array<i64: 1>, scalar_prefetch = 0 : i64, scratch_operands = 1 : i64, tpu.core_type = #tpu.core_type<tc>, window_params = [{pipeline_mode = #tpu.pipeline_mode<synchronous>, transform_indices = @transform_0, window_bounds = array<i64: 20, 32>}, {pipeline_mode = #tpu.pipeline_mode<synchronous>, transform_indices = @transform_1, window_bounds = array<i64: 32, 32>}, {pipeline_mode = #tpu.pipeline_mode<synchronous>, transform_indices = @transform_2, window_bounds = array<i64: 1, 32>}, {pipeline_mode = #tpu.pipeline_mode<synchronous>, transform_indices = @transform_3, window_bounds = array<i64: 32, 8>}, {pipeline_mode = #tpu.pipeline_mode<synchronous>, transform_indices = @transform_4, window_bounds = array<i64: 1, 8>}, {pipeline_mode = #tpu.pipeline_mode<synchronous>, transform_indices = @transform_5, window_bounds = array<i64: 2, 8, 8>}, {pipeline_mode = #tpu.pipeline_mode<synchronous>, transform_indices = @transform_6, window_bounds = array<i64: 2, 1>}, {pipeline_mode = #tpu.pipeline_mode<synchronous>, transform_indices = @transform_7, window_bounds = array<i64: 2, 8>}, {pipeline_mode = #tpu.pipeline_mode<synchronous>, transform_indices = @transform_8, window_bounds = array<i64: 1, 8>}, {pipeline_mode = #tpu.pipeline_mode<synchronous>, transform_indices = @transform_9, window_bounds = array<i64: 1, 8>}, {pipeline_mode = #tpu.pipeline_mode<synchronous>, transform_indices = @transform_10, window_bounds = array<i64: 8, 8>}, {pipeline_mode = #tpu.pipeline_mode<synchronous>, transform_indices = @transform_11, window_bounds = array<i64: 20, 8>}, {pipeline_mode = #tpu.pipeline_mode<synchronous>, transform_indices = @transform_12, window_bounds = array<i64: 1, 1>}]} {
    %c0 = arith.constant 0 : index
    %c0_0 = arith.constant 0 : index
    %0 = vector.load %arg1[%c0, %c0_0] : memref<20x32xf32, #tpu.memory_space<vmem>>, vector<20x32xf32>
    %1 = arith.truncf %0 : vector<20x32xf32> to vector<20x32xbf16>
    %c0_1 = arith.constant 0 : index
    %c0_2 = arith.constant 0 : index
    %2 = vector.load %arg2[%c0_1, %c0_2] : memref<32x32xf32, #tpu.memory_space<vmem>>, vector<32x32xf32>
    %3 = arith.truncf %2 : vector<32x32xf32> to vector<32x32xbf16>
    %cst = arith.constant dense<0.000000e+00> : vector<20x32xf32>
    %4 = tpu.matmul %1, %3, %cst {dimension_numbers = #tpu.dot_dimension_numbers<[1], [0], [0], [1], [0, 0, 1, 1], [], []>} : vector<20x32xbf16>, vector<32x32xbf16>, vector<20x32xf32> -> vector<20x32xf32>
    %c0_3 = arith.constant 0 : index
    %c0_4 = arith.constant 0 : index
    %5 = vector.load %arg3[%c0_3, %c0_4] : memref<1x32xf32, #tpu.memory_space<vmem>>, vector<1x32xf32>
    %6 = vector.broadcast %5 : vector<1x32xf32> to vector<20x32xf32>
    %7 = arith.addf %4, %6 : vector<20x32xf32>
    %8 = math.tanh %7 : vector<20x32xf32>
    %c0_5 = arith.constant 0 : index
    %c0_6 = arith.constant 0 : index
    %9 = vector.load %arg4[%c0_5, %c0_6] : memref<32x8xf32, #tpu.memory_space<vmem>>, vector<32x8xf32>
    %10 = arith.truncf %9 : vector<32x8xf32> to vector<32x8xbf16>
    %11 = arith.truncf %8 : vector<20x32xf32> to vector<20x32xbf16>
    %cst_7 = arith.constant dense<0.000000e+00> : vector<20x8xf32>
    %12 = tpu.matmul %11, %10, %cst_7 {dimension_numbers = #tpu.dot_dimension_numbers<[1], [0], [0], [1], [0, 0, 1, 1], [], []>} : vector<20x32xbf16>, vector<32x8xbf16>, vector<20x8xf32> -> vector<20x8xf32>
    %c0_8 = arith.constant 0 : index
    %c0_9 = arith.constant 0 : index
    %13 = vector.load %arg5[%c0_8, %c0_9] : memref<1x8xf32, #tpu.memory_space<vmem>>, vector<1x8xf32>
    %14 = vector.broadcast %13 : vector<1x8xf32> to vector<20x8xf32>
    %15 = arith.addf %12, %14 : vector<20x8xf32>
    %c0_10 = arith.constant 0 : index
    %c0_11 = arith.constant 0 : index
    %16 = vector.load %arg12[%c0_10, %c0_11] : memref<20x8xf32, #tpu.memory_space<vmem>>, vector<20x8xf32>
    tpu.vector_store %arg12[%c0_10, %c0_11], %15 {strides = array<i32>} : memref<20x8xf32, #tpu.memory_space<vmem>>, vector<20x8xf32>,
    %c1 = arith.constant 1 : index
    %c0_12 = arith.constant 0 : index
    %17 = vector.load %arg12[%c1, %c0_12] : memref<20x8xf32, #tpu.memory_space<vmem>>, vector<8x8xf32>
    %c0_13 = arith.constant 0 : index
    %c0_14 = arith.constant 0 : index
    %c0_15 = arith.constant 0 : index
    %18 = vector.load %arg14[%c0_13, %c0_14, %c0_15] : memref<2x8x8xf32, #tpu.memory_space<vmem>>, vector<1x8x8xf32>
    %19 = vector.shape_cast %18 : vector<1x8x8xf32> to vector<8x8xf32>
    %20 = vector.shape_cast %17 : vector<8x8xf32> to vector<1x8x8xf32>
    tpu.vector_store %arg14[%c0_13, %c0_14, %c0_15], %20 {strides = array<i32>} : memref<2x8x8xf32, #tpu.memory_space<vmem>>, vector<1x8x8xf32>,
    %c11 = arith.constant 11 : index
    %c0_16 = arith.constant 0 : index
    %21 = vector.load %arg12[%c11, %c0_16] : memref<20x8xf32, #tpu.memory_space<vmem>>, vector<8x8xf32>
    %c1_17 = arith.constant 1 : index
    %c0_18 = arith.constant 0 : index
    %c0_19 = arith.constant 0 : index
    %22 = vector.load %arg14[%c1_17, %c0_18, %c0_19] : memref<2x8x8xf32, #tpu.memory_space<vmem>>, vector<1x8x8xf32>
    %23 = vector.shape_cast %22 : vector<1x8x8xf32> to vector<8x8xf32>
    %24 = vector.shape_cast %21 : vector<8x8xf32> to vector<1x8x8xf32>
    tpu.vector_store %arg14[%c1_17, %c0_18, %c0_19], %24 {strides = array<i32>} : memref<2x8x8xf32, #tpu.memory_space<vmem>>, vector<1x8x8xf32>,
    %c0_20 = arith.constant 0 : index
    %c0_21 = arith.constant 0 : index
    %c0_22 = arith.constant 0 : index
    %25 = vector.load %arg14[%c0_20, %c0_21, %c0_22] : memref<2x8x8xf32, #tpu.memory_space<vmem>>, vector<2x8x8xf32>
    %c0_23 = arith.constant 0 : index
    %c0_24 = arith.constant 0 : index
    %26 = vector.load %arg8[%c0_23, %c0_24] : memref<2x8xf32, #tpu.memory_space<vmem>>, vector<2x8xf32>
    %c0_25 = arith.constant 0 : index
    %c0_26 = arith.constant 0 : index
    %27 = vector.load %arg9[%c0_25, %c0_26] : memref<1x8xf32, #tpu.memory_space<vmem>>, vector<1x8xf32>
    %c0_27 = arith.constant 0 : index
    %c0_28 = arith.constant 0 : index
    %28 = vector.load %arg10[%c0_27, %c0_28] : memref<1x8xf32, #tpu.memory_space<vmem>>, vector<1x8xf32>
    %c0_29 = arith.constant 0 : index
    %c0_30 = arith.constant 0 : index
    %29 = vector.load %arg11[%c0_29, %c0_30] : memref<8x8xf32, #tpu.memory_space<vmem>>, vector<8x8xf32>
    %c0_31 = arith.constant 0 : index
    %c0_32 = arith.constant 0 : index
    %c0_33 = arith.constant 0 : index
    %30 = vector.load %arg6[%c0_31, %c0_32, %c0_33] : memref<2x8x8xf32, #tpu.memory_space<vmem>>, vector<2x8x8xf32>
    %31 = arith.mulf %25, %30 : vector<2x8x8xf32>
    %cst_34 = arith.constant dense<0.000000e+00> : vector<2x8xf32>
    %32 = vector.multi_reduction <add>, %31, %cst_34 [2] : vector<2x8x8xf32> to vector<2x8xf32>
    %cst_35 = arith.constant dense<0.000000e+00> : vector<2xf32>
    %33 = vector.multi_reduction <add>, %32, %cst_35 [1] : vector<2x8xf32> to vector<2xf32>
    %34 = vector.shape_cast %33 : vector<2xf32> to vector<2x1xf32>
    %c0_36 = arith.constant 0 : index
    %c0_37 = arith.constant 0 : index
    %35 = vector.load %arg7[%c0_36, %c0_37] : memref<2x1xf32, #tpu.memory_space<vmem>>, vector<2x1xf32>
    %36 = arith.addf %35, %34 : vector<2x1xf32>
    %37 = vector.extract_strided_slice %25 {offsets = [0, 0, 0], sizes = [2, 1, 8], strides = [1, 1, 1]} : vector<2x8x8xf32> to vector<2x1x8xf32>
    %38 = vector.shape_cast %37 : vector<2x1x8xf32> to vector<2x8xf32>
    %39 = vector.broadcast %27 : vector<1x8xf32> to vector<2x8xf32>
    %40 = arith.addf %39, %38 : vector<2x8xf32>
    %41 = vector.extract_strided_slice %26 {offsets = [0, 1], sizes = [2, 1], strides = [1, 1]} : vector<2x8xf32> to vector<2x1xf32>
    %42 = vector.shape_cast %40 : vector<2x8xf32> to vector<2x8x1xf32>
    %43 = vector.shape_cast %29 : vector<8x8xf32> to vector<1x8x8xf32>
    %44 = vector.broadcast %42 : vector<2x8x1xf32> to vector<2x8x8xf32>
    %45 = vector.broadcast %43 : vector<1x8x8xf32> to vector<2x8x8xf32>
    %46 = arith.addf %44, %45 : vector<2x8x8xf32>
    %47 = vector.extract_strided_slice %25 {offsets = [0, 1, 0], sizes = [2, 1, 8], strides = [1, 1, 1]} : vector<2x8x8xf32> to vector<2x1x8xf32>
    %48 = vector.shape_cast %47 : vector<2x1x8xf32> to vector<2x8xf32>
    %49 = vector.shape_cast %48 : vector<2x8xf32> to vector<2x1x8xf32>
    %50 = vector.broadcast %49 : vector<2x1x8xf32> to vector<2x8x8xf32>
    %51 = arith.addf %46, %50 : vector<2x8x8xf32>
    %cst_38 = arith.constant dense<0xFF800000> : vector<2x8xf32>
    %52 = vector.multi_reduction <maximumf>, %51, %cst_38 [1] : vector<2x8x8xf32> to vector<2x8xf32>
    %53 = vector.shape_cast %52 : vector<2x8xf32> to vector<2x1x8xf32>
    %54 = vector.broadcast %53 : vector<2x1x8xf32> to vector<2x8x8xf32>
    %55 = arith.subf %51, %54 : vector<2x8x8xf32>
    %56 = math.exp %55 : vector<2x8x8xf32>
    %cst_39 = arith.constant dense<0.000000e+00> : vector<2x8xf32>
    %57 = vector.multi_reduction <add>, %56, %cst_39 [1] : vector<2x8x8xf32> to vector<2x8xf32>
    %58 = math.log %57 : vector<2x8xf32>
    %59 = vector.shape_cast %53 : vector<2x1x8xf32> to vector<2x8xf32>
    %60 = arith.addf %58, %59 : vector<2x8xf32>
    %cst_40 = arith.constant 0.000000e+00 : f32
    %61 = vector.broadcast %cst_40 : f32 to vector<2x1xf32>
    %62 = arith.cmpf ogt, %41, %61 : vector<2x1xf32>
    %63 = vector.shape_cast %62 : vector<2x1xi1> to vector<2x1xi1>
    %64 = vector.broadcast %63 : vector<2x1xi1> to vector<2x8xi1>
    %65 = arith.select %64, %60, %40 : vector<2x8xi1>, vector<2x8xf32>
    %66 = vector.extract_strided_slice %26 {offsets = [0, 2], sizes = [2, 1], strides = [1, 1]} : vector<2x8xf32> to vector<2x1xf32>
    %67 = vector.shape_cast %65 : vector<2x8xf32> to vector<2x8x1xf32>
    %68 = vector.shape_cast %29 : vector<8x8xf32> to vector<1x8x8xf32>
    %69 = vector.broadcast %67 : vector<2x8x1xf32> to vector<2x8x8xf32>
    %70 = vector.broadcast %68 : vector<1x8x8xf32> to vector<2x8x8xf32>
    %71 = arith.addf %69, %70 : vector<2x8x8xf32>
    %72 = vector.extract_strided_slice %25 {offsets = [0, 2, 0], sizes = [2, 1, 8], strides = [1, 1, 1]} : vector<2x8x8xf32> to vector<2x1x8xf32>
    %73 = vector.shape_cast %72 : vector<2x1x8xf32> to vector<2x8xf32>
    %74 = vector.shape_cast %73 : vector<2x8xf32> to vector<2x1x8xf32>
    %75 = vector.broadcast %74 : vector<2x1x8xf32> to vector<2x8x8xf32>
    %76 = arith.addf %71, %75 : vector<2x8x8xf32>
    %cst_41 = arith.constant dense<0xFF800000> : vector<2x8xf32>
    %77 = vector.multi_reduction <maximumf>, %76, %cst_41 [1] : vector<2x8x8xf32> to vector<2x8xf32>
    %78 = vector.shape_cast %77 : vector<2x8xf32> to vector<2x1x8xf32>
    %79 = vector.broadcast %78 : vector<2x1x8xf32> to vector<2x8x8xf32>
    %80 = arith.subf %76, %79 : vector<2x8x8xf32>
    %81 = math.exp %80 : vector<2x8x8xf32>
    %cst_42 = arith.constant dense<0.000000e+00> : vector<2x8xf32>
    %82 = vector.multi_reduction <add>, %81, %cst_42 [1] : vector<2x8x8xf32> to vector<2x8xf32>
    %83 = math.log %82 : vector<2x8xf32>
    %84 = vector.shape_cast %78 : vector<2x1x8xf32> to vector<2x8xf32>
    %85 = arith.addf %83, %84 : vector<2x8xf32>
    %cst_43 = arith.constant 0.000000e+00 : f32
    %86 = vector.broadcast %cst_43 : f32 to vector<2x1xf32>
    %87 = arith.cmpf ogt, %66, %86 : vector<2x1xf32>
    %88 = vector.shape_cast %87 : vector<2x1xi1> to vector<2x1xi1>
    %89 = vector.broadcast %88 : vector<2x1xi1> to vector<2x8xi1>
    %90 = arith.select %89, %85, %65 : vector<2x8xi1>, vector<2x8xf32>
    %91 = vector.extract_strided_slice %26 {offsets = [0, 3], sizes = [2, 1], strides = [1, 1]} : vector<2x8xf32> to vector<2x1xf32>
    %92 = vector.shape_cast %90 : vector<2x8xf32> to vector<2x8x1xf32>
    %93 = vector.shape_cast %29 : vector<8x8xf32> to vector<1x8x8xf32>
    %94 = vector.broadcast %92 : vector<2x8x1xf32> to vector<2x8x8xf32>
    %95 = vector.broadcast %93 : vector<1x8x8xf32> to vector<2x8x8xf32>
    %96 = arith.addf %94, %95 : vector<2x8x8xf32>
    %97 = vector.extract_strided_slice %25 {offsets = [0, 3, 0], sizes = [2, 1, 8], strides = [1, 1, 1]} : vector<2x8x8xf32> to vector<2x1x8xf32>
    %98 = vector.shape_cast %97 : vector<2x1x8xf32> to vector<2x8xf32>
    %99 = vector.shape_cast %98 : vector<2x8xf32> to vector<2x1x8xf32>
    %100 = vector.broadcast %99 : vector<2x1x8xf32> to vector<2x8x8xf32>
    %101 = arith.addf %96, %100 : vector<2x8x8xf32>
    %cst_44 = arith.constant dense<0xFF800000> : vector<2x8xf32>
    %102 = vector.multi_reduction <maximumf>, %101, %cst_44 [1] : vector<2x8x8xf32> to vector<2x8xf32>
    %103 = vector.shape_cast %102 : vector<2x8xf32> to vector<2x1x8xf32>
    %104 = vector.broadcast %103 : vector<2x1x8xf32> to vector<2x8x8xf32>
    %105 = arith.subf %101, %104 : vector<2x8x8xf32>
    %106 = math.exp %105 : vector<2x8x8xf32>
    %cst_45 = arith.constant dense<0.000000e+00> : vector<2x8xf32>
    %107 = vector.multi_reduction <add>, %106, %cst_45 [1] : vector<2x8x8xf32> to vector<2x8xf32>
    %108 = math.log %107 : vector<2x8xf32>
    %109 = vector.shape_cast %103 : vector<2x1x8xf32> to vector<2x8xf32>
    %110 = arith.addf %108, %109 : vector<2x8xf32>
    %cst_46 = arith.constant 0.000000e+00 : f32
    %111 = vector.broadcast %cst_46 : f32 to vector<2x1xf32>
    %112 = arith.cmpf ogt, %91, %111 : vector<2x1xf32>
    %113 = vector.shape_cast %112 : vector<2x1xi1> to vector<2x1xi1>
    %114 = vector.broadcast %113 : vector<2x1xi1> to vector<2x8xi1>
    %115 = arith.select %114, %110, %90 : vector<2x8xi1>, vector<2x8xf32>
    %116 = vector.extract_strided_slice %26 {offsets = [0, 4], sizes = [2, 1], strides = [1, 1]} : vector<2x8xf32> to vector<2x1xf32>
    %117 = vector.shape_cast %115 : vector<2x8xf32> to vector<2x8x1xf32>
    %118 = vector.shape_cast %29 : vector<8x8xf32> to vector<1x8x8xf32>
    %119 = vector.broadcast %117 : vector<2x8x1xf32> to vector<2x8x8xf32>
    %120 = vector.broadcast %118 : vector<1x8x8xf32> to vector<2x8x8xf32>
    %121 = arith.addf %119, %120 : vector<2x8x8xf32>
    %122 = vector.extract_strided_slice %25 {offsets = [0, 4, 0], sizes = [2, 1, 8], strides = [1, 1, 1]} : vector<2x8x8xf32> to vector<2x1x8xf32>
    %123 = vector.shape_cast %122 : vector<2x1x8xf32> to vector<2x8xf32>
    %124 = vector.shape_cast %123 : vector<2x8xf32> to vector<2x1x8xf32>
    %125 = vector.broadcast %124 : vector<2x1x8xf32> to vector<2x8x8xf32>
    %126 = arith.addf %121, %125 : vector<2x8x8xf32>
    %cst_47 = arith.constant dense<0xFF800000> : vector<2x8xf32>
    %127 = vector.multi_reduction <maximumf>, %126, %cst_47 [1] : vector<2x8x8xf32> to vector<2x8xf32>
    %128 = vector.shape_cast %127 : vector<2x8xf32> to vector<2x1x8xf32>
    %129 = vector.broadcast %128 : vector<2x1x8xf32> to vector<2x8x8xf32>
    %130 = arith.subf %126, %129 : vector<2x8x8xf32>
    %131 = math.exp %130 : vector<2x8x8xf32>
    %cst_48 = arith.constant dense<0.000000e+00> : vector<2x8xf32>
    %132 = vector.multi_reduction <add>, %131, %cst_48 [1] : vector<2x8x8xf32> to vector<2x8xf32>
    %133 = math.log %132 : vector<2x8xf32>
    %134 = vector.shape_cast %128 : vector<2x1x8xf32> to vector<2x8xf32>
    %135 = arith.addf %133, %134 : vector<2x8xf32>
    %cst_49 = arith.constant 0.000000e+00 : f32
    %136 = vector.broadcast %cst_49 : f32 to vector<2x1xf32>
    %137 = arith.cmpf ogt, %116, %136 : vector<2x1xf32>
    %138 = vector.shape_cast %137 : vector<2x1xi1> to vector<2x1xi1>
    %139 = vector.broadcast %138 : vector<2x1xi1> to vector<2x8xi1>
    %140 = arith.select %139, %135, %115 : vector<2x8xi1>, vector<2x8xf32>
    %141 = vector.extract_strided_slice %26 {offsets = [0, 5], sizes = [2, 1], strides = [1, 1]} : vector<2x8xf32> to vector<2x1xf32>
    %142 = vector.shape_cast %140 : vector<2x8xf32> to vector<2x8x1xf32>
    %143 = vector.shape_cast %29 : vector<8x8xf32> to vector<1x8x8xf32>
    %144 = vector.broadcast %142 : vector<2x8x1xf32> to vector<2x8x8xf32>
    %145 = vector.broadcast %143 : vector<1x8x8xf32> to vector<2x8x8xf32>
    %146 = arith.addf %144, %145 : vector<2x8x8xf32>
    %147 = vector.extract_strided_slice %25 {offsets = [0, 5, 0], sizes = [2, 1, 8], strides = [1, 1, 1]} : vector<2x8x8xf32> to vector<2x1x8xf32>
    %148 = vector.shape_cast %147 : vector<2x1x8xf32> to vector<2x8xf32>
    %149 = vector.shape_cast %148 : vector<2x8xf32> to vector<2x1x8xf32>
    %150 = vector.broadcast %149 : vector<2x1x8xf32> to vector<2x8x8xf32>
    %151 = arith.addf %146, %150 : vector<2x8x8xf32>
    %cst_50 = arith.constant dense<0xFF800000> : vector<2x8xf32>
    %152 = vector.multi_reduction <maximumf>, %151, %cst_50 [1] : vector<2x8x8xf32> to vector<2x8xf32>
    %153 = vector.shape_cast %152 : vector<2x8xf32> to vector<2x1x8xf32>
    %154 = vector.broadcast %153 : vector<2x1x8xf32> to vector<2x8x8xf32>
    %155 = arith.subf %151, %154 : vector<2x8x8xf32>
    %156 = math.exp %155 : vector<2x8x8xf32>
    %cst_51 = arith.constant dense<0.000000e+00> : vector<2x8xf32>
    %157 = vector.multi_reduction <add>, %156, %cst_51 [1] : vector<2x8x8xf32> to vector<2x8xf32>
    %158 = math.log %157 : vector<2x8xf32>
    %159 = vector.shape_cast %153 : vector<2x1x8xf32> to vector<2x8xf32>
    %160 = arith.addf %158, %159 : vector<2x8xf32>
    %cst_52 = arith.constant 0.000000e+00 : f32
    %161 = vector.broadcast %cst_52 : f32 to vector<2x1xf32>
    %162 = arith.cmpf ogt, %141, %161 : vector<2x1xf32>
    %163 = vector.shape_cast %162 : vector<2x1xi1> to vector<2x1xi1>
    %164 = vector.broadcast %163 : vector<2x1xi1> to vector<2x8xi1>
    %165 = arith.select %164, %160, %140 : vector<2x8xi1>, vector<2x8xf32>
    %166 = vector.extract_strided_slice %26 {offsets = [0, 6], sizes = [2, 1], strides = [1, 1]} : vector<2x8xf32> to vector<2x1xf32>
    %167 = vector.shape_cast %165 : vector<2x8xf32> to vector<2x8x1xf32>
    %168 = vector.shape_cast %29 : vector<8x8xf32> to vector<1x8x8xf32>
    %169 = vector.broadcast %167 : vector<2x8x1xf32> to vector<2x8x8xf32>
    %170 = vector.broadcast %168 : vector<1x8x8xf32> to vector<2x8x8xf32>
    %171 = arith.addf %169, %170 : vector<2x8x8xf32>
    %172 = vector.extract_strided_slice %25 {offsets = [0, 6, 0], sizes = [2, 1, 8], strides = [1, 1, 1]} : vector<2x8x8xf32> to vector<2x1x8xf32>
    %173 = vector.shape_cast %172 : vector<2x1x8xf32> to vector<2x8xf32>
    %174 = vector.shape_cast %173 : vector<2x8xf32> to vector<2x1x8xf32>
    %175 = vector.broadcast %174 : vector<2x1x8xf32> to vector<2x8x8xf32>
    %176 = arith.addf %171, %175 : vector<2x8x8xf32>
    %cst_53 = arith.constant dense<0xFF800000> : vector<2x8xf32>
    %177 = vector.multi_reduction <maximumf>, %176, %cst_53 [1] : vector<2x8x8xf32> to vector<2x8xf32>
    %178 = vector.shape_cast %177 : vector<2x8xf32> to vector<2x1x8xf32>
    %179 = vector.broadcast %178 : vector<2x1x8xf32> to vector<2x8x8xf32>
    %180 = arith.subf %176, %179 : vector<2x8x8xf32>
    %181 = math.exp %180 : vector<2x8x8xf32>
    %cst_54 = arith.constant dense<0.000000e+00> : vector<2x8xf32>
    %182 = vector.multi_reduction <add>, %181, %cst_54 [1] : vector<2x8x8xf32> to vector<2x8xf32>
    %183 = math.log %182 : vector<2x8xf32>
    %184 = vector.shape_cast %178 : vector<2x1x8xf32> to vector<2x8xf32>
    %185 = arith.addf %183, %184 : vector<2x8xf32>
    %cst_55 = arith.constant 0.000000e+00 : f32
    %186 = vector.broadcast %cst_55 : f32 to vector<2x1xf32>
    %187 = arith.cmpf ogt, %166, %186 : vector<2x1xf32>
    %188 = vector.shape_cast %187 : vector<2x1xi1> to vector<2x1xi1>
    %189 = vector.broadcast %188 : vector<2x1xi1> to vector<2x8xi1>
    %190 = arith.select %189, %185, %165 : vector<2x8xi1>, vector<2x8xf32>
    %191 = vector.extract_strided_slice %26 {offsets = [0, 7], sizes = [2, 1], strides = [1, 1]} : vector<2x8xf32> to vector<2x1xf32>
    %192 = vector.shape_cast %190 : vector<2x8xf32> to vector<2x8x1xf32>
    %193 = vector.shape_cast %29 : vector<8x8xf32> to vector<1x8x8xf32>
    %194 = vector.broadcast %192 : vector<2x8x1xf32> to vector<2x8x8xf32>
    %195 = vector.broadcast %193 : vector<1x8x8xf32> to vector<2x8x8xf32>
    %196 = arith.addf %194, %195 : vector<2x8x8xf32>
    %197 = vector.extract_strided_slice %25 {offsets = [0, 7, 0], sizes = [2, 1, 8], strides = [1, 1, 1]} : vector<2x8x8xf32> to vector<2x1x8xf32>
    %198 = vector.shape_cast %197 : vector<2x1x8xf32> to vector<2x8xf32>
    %199 = vector.shape_cast %198 : vector<2x8xf32> to vector<2x1x8xf32>
    %200 = vector.broadcast %199 : vector<2x1x8xf32> to vector<2x8x8xf32>
    %201 = arith.addf %196, %200 : vector<2x8x8xf32>
    %cst_56 = arith.constant dense<0xFF800000> : vector<2x8xf32>
    %202 = vector.multi_reduction <maximumf>, %201, %cst_56 [1] : vector<2x8x8xf32> to vector<2x8xf32>
    %203 = vector.shape_cast %202 : vector<2x8xf32> to vector<2x1x8xf32>
    %204 = vector.broadcast %203 : vector<2x1x8xf32> to vector<2x8x8xf32>
    %205 = arith.subf %201, %204 : vector<2x8x8xf32>
    %206 = math.exp %205 : vector<2x8x8xf32>
    %cst_57 = arith.constant dense<0.000000e+00> : vector<2x8xf32>
    %207 = vector.multi_reduction <add>, %206, %cst_57 [1] : vector<2x8x8xf32> to vector<2x8xf32>
    %208 = math.log %207 : vector<2x8xf32>
    %209 = vector.shape_cast %203 : vector<2x1x8xf32> to vector<2x8xf32>
    %210 = arith.addf %208, %209 : vector<2x8xf32>
    %cst_58 = arith.constant 0.000000e+00 : f32
    %211 = vector.broadcast %cst_58 : f32 to vector<2x1xf32>
    %212 = arith.cmpf ogt, %191, %211 : vector<2x1xf32>
    %213 = vector.shape_cast %212 : vector<2x1xi1> to vector<2x1xi1>
    %214 = vector.broadcast %213 : vector<2x1xi1> to vector<2x8xi1>
    %215 = arith.select %214, %210, %190 : vector<2x8xi1>, vector<2x8xf32>
    %216 = vector.broadcast %28 : vector<1x8xf32> to vector<2x8xf32>
    %217 = arith.addf %215, %216 : vector<2x8xf32>
    %cst_59 = arith.constant dense<0xFF800000> : vector<2xf32>
    %218 = vector.multi_reduction <maximumf>, %217, %cst_59 [1] : vector<2x8xf32> to vector<2xf32>
    %219 = vector.shape_cast %218 : vector<2xf32> to vector<2x1xf32>
    %220 = vector.broadcast %219 : vector<2x1xf32> to vector<2x8xf32>
    %221 = arith.subf %217, %220 : vector<2x8xf32>
    %222 = math.exp %221 : vector<2x8xf32>
    %cst_60 = arith.constant dense<0.000000e+00> : vector<2xf32>
    %223 = vector.multi_reduction <add>, %222, %cst_60 [1] : vector<2x8xf32> to vector<2xf32>
    %224 = vector.shape_cast %223 : vector<2xf32> to vector<2x1xf32>
    %225 = math.log %224 : vector<2x1xf32>
    %226 = arith.addf %225, %219 : vector<2x1xf32>
    %227 = arith.subf %36, %226 : vector<2x1xf32>
    %cst_61 = arith.constant dense<0.000000e+00> : vector<1xf32>
    %228 = vector.multi_reduction <add>, %227, %cst_61 [0] : vector<2x1xf32> to vector<1xf32>
    %229 = vector.shape_cast %228 : vector<1xf32> to vector<1x1xf32>
    %cst_62 = arith.constant 2.000000e+00 : f32
    %230 = vector.broadcast %cst_62 : f32 to vector<1x1xf32>
    %231 = arith.divf %229, %230 : vector<1x1xf32>
    %c0_63 = arith.constant 0 : index
    %c0_64 = arith.constant 0 : index
    %232 = vector.load %arg13[%c0_63, %c0_64] : memref<1x1xf32, #tpu.memory_space<vmem>>, vector<1x1xf32>
    tpu.vector_store %arg13[%c0_63, %c0_64], %231 {strides = array<i32>} : memref<1x1xf32, #tpu.memory_space<vmem>>, vector<1x1xf32>,
    return
  }
  func.func @transform_0(%arg0: i32) -> (i32, i32) {
    %c0_i32 = arith.constant 0 : i32
    %c0_i32_0 = arith.constant 0 : i32
    %c0_i32_1 = arith.constant 0 : i32
    return %c0_i32, %c0_i32_0 : i32, i32
  }
  func.func @transform_1(%arg0: i32) -> (i32, i32) {
    %c0_i32 = arith.constant 0 : i32
    %c0_i32_0 = arith.constant 0 : i32
    %c0_i32_1 = arith.constant 0 : i32
    return %c0_i32, %c0_i32_0 : i32, i32
  }
  func.func @transform_2(%arg0: i32) -> (i32, i32) {
    %c0_i32 = arith.constant 0 : i32
    %c0_i32_0 = arith.constant 0 : i32
    %c0_i32_1 = arith.constant 0 : i32
    return %c0_i32, %c0_i32_0 : i32, i32
  }
  func.func @transform_3(%arg0: i32) -> (i32, i32) {
    %c0_i32 = arith.constant 0 : i32
    %c0_i32_0 = arith.constant 0 : i32
    %c0_i32_1 = arith.constant 0 : i32
    return %c0_i32, %c0_i32_0 : i32, i32
  }
  func.func @transform_4(%arg0: i32) -> (i32, i32) {
    %c0_i32 = arith.constant 0 : i32
    %c0_i32_0 = arith.constant 0 : i32
    %c0_i32_1 = arith.constant 0 : i32
    return %c0_i32, %c0_i32_0 : i32, i32
  }
  func.func @transform_5(%arg0: i32) -> (i32, i32, i32) {
    %c0_i32 = arith.constant 0 : i32
    %c0_i32_0 = arith.constant 0 : i32
    %c0_i32_1 = arith.constant 0 : i32
    %c0_i32_2 = arith.constant 0 : i32
    return %c0_i32, %c0_i32_0, %c0_i32_1 : i32, i32, i32
  }
  func.func @transform_6(%arg0: i32) -> (i32, i32) {
    %c0_i32 = arith.constant 0 : i32
    %c0_i32_0 = arith.constant 0 : i32
    %c0_i32_1 = arith.constant 0 : i32
    return %c0_i32, %c0_i32_0 : i32, i32
  }
  func.func @transform_7(%arg0: i32) -> (i32, i32) {
    %c0_i32 = arith.constant 0 : i32
    %c0_i32_0 = arith.constant 0 : i32
    %c0_i32_1 = arith.constant 0 : i32
    return %c0_i32, %c0_i32_0 : i32, i32
  }
  func.func @transform_8(%arg0: i32) -> (i32, i32) {
    %c0_i32 = arith.constant 0 : i32
    %c0_i32_0 = arith.constant 0 : i32
    %c0_i32_1 = arith.constant 0 : i32
    return %c0_i32, %c0_i32_0 : i32, i32
  }
  func.func @transform_9(%arg0: i32) -> (i32, i32) {
    %c0_i32 = arith.constant 0 : i32
    %c0_i32_0 = arith.constant 0 : i32
    %c0_i32_1 = arith.constant 0 : i32
    return %c0_i32, %c0_i32_0 : i32, i32
  }
  func.func @transform_10(%arg0: i32) -> (i32, i32) {
    %c0_i32 = arith.constant 0 : i32
    %c0_i32_0 = arith.constant 0 : i32
    %c0_i32_1 = arith.constant 0 : i32
    return %c0_i32, %c0_i32_0 : i32, i32
  }
  func.func @transform_11(%arg0: i32) -> (i32, i32) {
    %c0_i32 = arith.constant 0 : i32
    %c0_i32_0 = arith.constant 0 : i32
    %c0_i32_1 = arith.constant 0 : i32
    return %c0_i32, %c0_i32_0 : i32, i32
  }
  func.func @transform_12(%arg0: i32) -> (i32, i32) {
    %c0_i32 = arith.constant 0 : i32
    %c0_i32_0 = arith.constant 0 : i32
    %c0_i32_1 = arith.constant 0 : i32
    return %c0_i32, %c0_i32_0 : i32, i32
  }
}

</mosaic_0001>

<llo_original>
// kernel: tpu_custom_call.1
$region0: #{tpu_custom_call.1}
  #allocation0 [shape = 'u32[]', space=smem, size = 0x4, offset = 0x4, fixed_abs, tag = 'smem constant byte address 0x4 - core index']
  #allocation1 [shape = 'u32[144,128]{1,0:T(1,128)}', space=vmem, size = 0x12000, scoped, tag = 'internal scratch']
  #allocation2 [shape = 'f32[2,8,8]{2,1,0:T(8,128)}', space=vmem, size = 0x2000, scoped, tag = 'scratch operand']
  %s0 = inlined_call_operand.hbm [shape: f32[20,32], index: 0, kind: input, shape index: {}]
  %s1 = inlined_call_operand.vmem [shape: f32[32,32], index: 1, kind: input, shape index: {}]
  %s2 = inlined_call_operand.hbm [shape: f32[1,32], index: 2, kind: input, shape index: {}]
  %s3 = inlined_call_operand.vmem [shape: f32[32,8], index: 3, kind: input, shape index: {}]
  %s4 = inlined_call_operand.hbm [shape: f32[1,8], index: 4, kind: input, shape index: {}]
  %s5 = inlined_call_operand.vmem [shape: f32[2,8,8], index: 5, kind: input, shape index: {}]
  %s6 = inlined_call_operand.vmem [shape: f32[2,1], index: 6, kind: input, shape index: {}]
  %s7 = inlined_call_operand.vmem [shape: f32[2,8], index: 7, kind: input, shape index: {}]
  %s8 = inlined_call_operand.vmem [shape: f32[1,8], index: 8, kind: input, shape index: {}]
  %s9 = inlined_call_operand.vmem [shape: f32[1,8], index: 9, kind: input, shape index: {}]
  %s10 = inlined_call_operand.vmem [shape: f32[8,8], index: 10, kind: input, shape index: {}]
  %s11 = inlined_call_operand.vmem [shape: f32[20,8], index: 11, kind: output, shape index: {0}]
  %s12 = inlined_call_operand.hbm [shape: f32[1,1], index: 12, kind: output, shape index: {1}]
  %13 = xla_tuple %s11, %s12
  %s14 = sld [smem:[#allocation0]]
  $region74: #{tpu_custom_call.1} parent=0
    _
  %s16 = ssub.s32 1, %s14
  %s17 = scalar_select 0, %s16, %s14
  $region1: #{tpu_custom_call.1} parent=0
    #allocation3 [shape = 'u8[12288]{0}', space=vmem, size = 0x3000, scoped, tag = 'input window, operand 0, single buffered']
    #allocation4 [shape = 's32[1]{0}', space=sflag, size = 0x4, scoped, tag = 'scoped memory for tpu_custom_call.1']
    #allocation5 [shape = 's32[1]{0}', space=sflag, size = 0x4, scoped, tag = 'scoped memory for tpu_custom_call.1']
    #allocation6 [shape = 'u8[512]{0}', space=vmem, size = 0x400, scoped, tag = 'input window, operand 2, single buffered']
    #allocation7 [shape = 's32[1]{0}', space=sflag, size = 0x4, scoped, tag = 'scoped memory for tpu_custom_call.1']
    #allocation8 [shape = 'u8[512]{0}', space=vmem, size = 0x400, scoped, tag = 'input window, operand 4, single buffered']
    #allocation9 [shape = 'u8[512]{0}', space=vmem, size = 0x400, scoped, tag = 'output window, operand 1, single buffered']
    %18 = vsyncpa [#allocation4], 0
    %19 = vsyncpa [#allocation7], 0
    %20 = vsyncpa [#allocation5], 0
    // Predicated region
    $region2: #{tpu_custom_call.1} parent=1 // pred_check
      _
    $region3: #{tpu_custom_call.1} parent=1 // pred_check_branch
      %22 = sbr.rel (0) target = $region5
    $region4: #{tpu_custom_call.1} parent=1 // pred_region
      %s24 = ssub.s32 384, 384
      %25 = vsyncadd [#allocation4], %s24
      %s26 = sshll.u32 [#allocation3], 4
      %s27 = int_to_ptr.vmem [resolvable:$true] %s26
      %32 = dma.hbm_to_vmem [thread:$0]  %s0, 384, %s27, [#allocation4], 128, 128, 8
    $region5: #{tpu_custom_call.1} parent=1 // pred_fallthru
      _
    // Predicated region
    $region6: #{tpu_custom_call.1} parent=1 // pred_check
      _
    $region7: #{tpu_custom_call.1} parent=1 // pred_check_branch
      %34 = sbr.rel (0) target = $region9
    $region8: #{tpu_custom_call.1} parent=1 // pred_region
      _
    $region9: #{tpu_custom_call.1} parent=1 // pred_fallthru
      _
    // Predicated region
    $region10: #{tpu_custom_call.1} parent=1 // pred_check
      _
    $region11: #{tpu_custom_call.1} parent=1 // pred_check_branch
      %36 = sbr.rel (0) target = $region13
    $region12: #{tpu_custom_call.1} parent=1 // pred_region
      %s38 = ssub.s32 16, 16
      %39 = vsyncadd [#allocation7], %s38
      %s41 = sshll.u32 [#allocation6], 4
      %s42 = int_to_ptr.vmem [resolvable:$true] %s41
      %44 = dma.hbm_to_vmem [thread:$0]  %s2, 16, %s42, [#allocation7]
    $region13: #{tpu_custom_call.1} parent=1 // pred_fallthru
      _
    // Predicated region
    $region14: #{tpu_custom_call.1} parent=1 // pred_check
      _
    $region15: #{tpu_custom_call.1} parent=1 // pred_check_branch
      %46 = sbr.rel (0) target = $region17
    $region16: #{tpu_custom_call.1} parent=1 // pred_region
      _
    $region17: #{tpu_custom_call.1} parent=1 // pred_fallthru
      _
    // Predicated region
    $region18: #{tpu_custom_call.1} parent=1 // pred_check
      _
    $region19: #{tpu_custom_call.1} parent=1 // pred_check_branch
      %48 = sbr.rel (0) target = $region21
    $region20: #{tpu_custom_call.1} parent=1 // pred_region
      %s50 = ssub.s32 16, 16
      %51 = vsyncadd [#allocation7], %s50
      %s53 = sshll.u32 [#allocation8], 4
      %s54 = int_to_ptr.vmem [resolvable:$true] %s53
      %56 = dma.hbm_to_vmem [thread:$0]  %s4, 16, %s54, [#allocation7]
    $region21: #{tpu_custom_call.1} parent=1 // pred_fallthru
      _
    // Predicated region
    $region22: #{tpu_custom_call.1} parent=1 // pred_check
      _
    $region23: #{tpu_custom_call.1} parent=1 // pred_check_branch
      %58 = sbr.rel (0) target = $region25
    $region24: #{tpu_custom_call.1} parent=1 // pred_region
      _
    $region25: #{tpu_custom_call.1} parent=1 // pred_fallthru
      _
    // Predicated region
    $region26: #{tpu_custom_call.1} parent=1 // pred_check
      _
    $region27: #{tpu_custom_call.1} parent=1 // pred_check_branch
      %60 = sbr.rel (0) target = $region29
    $region28: #{tpu_custom_call.1} parent=1 // pred_region
      _
    $region29: #{tpu_custom_call.1} parent=1 // pred_fallthru
      _
    // Predicated region
    $region30: #{tpu_custom_call.1} parent=1 // pred_check
      _
    $region31: #{tpu_custom_call.1} parent=1 // pred_check_branch
      %62 = sbr.rel (0) target = $region33
    $region32: #{tpu_custom_call.1} parent=1 // pred_region
      _
    $region33: #{tpu_custom_call.1} parent=1 // pred_fallthru
      _
    // Predicated region
    $region34: #{tpu_custom_call.1} parent=1 // pred_check
      _
    $region35: #{tpu_custom_call.1} parent=1 // pred_check_branch
      %64 = sbr.rel (0) target = $region37
    $region36: #{tpu_custom_call.1} parent=1 // pred_region
      _
    $region37: #{tpu_custom_call.1} parent=1 // pred_fallthru
      _
    // Predicated region
    $region38: #{tpu_custom_call.1} parent=1 // pred_check
      _
    $region39: #{tpu_custom_call.1} parent=1 // pred_check_branch
      %66 = sbr.rel (0) target = $region41
    $region40: #{tpu_custom_call.1} parent=1 // pred_region
      _
    $region41: #{tpu_custom_call.1} parent=1 // pred_fallthru
      _
    // Predicated region
    $region42: #{tpu_custom_call.1} parent=1 // pred_check
      _
    $region43: #{tpu_custom_call.1} parent=1 // pred_check_branch
      %68 = sbr.rel (0) target = $region45
    $region44: #{tpu_custom_call.1} parent=1 // pred_region
      _
    $region45: #{tpu_custom_call.1} parent=1 // pred_fallthru
      _
    // Predicated region
    $region46: #{tpu_custom_call.1} parent=1 // pred_check
      _
    $region47: #{tpu_custom_call.1} parent=1 // pred_check_branch
      %70 = sbr.rel (0) target = $region49
    $region48: #{tpu_custom_call.1} parent=1 // pred_region
      %71 = dma.done [#allocation4], 384
    $region49: #{tpu_custom_call.1} parent=1 // pred_fallthru
      _
    // Predicated region
    $region50: #{tpu_custom_call.1} parent=1 // pred_check
      _
    $region51: #{tpu_custom_call.1} parent=1 // pred_check_branch
      %73 = sbr.rel (0) target = $region53
    $region52: #{tpu_custom_call.1} parent=1 // pred_region
      %74 = dma.done [#allocation7], 16
    $region53: #{tpu_custom_call.1} parent=1 // pred_fallthru
      _
    // Predicated region
    $region54: #{tpu_custom_call.1} parent=1 // pred_check
      _
    $region55: #{tpu_custom_call.1} parent=1 // pred_check_branch
      %76 = sbr.rel (0) target = $region57
    $region56: #{tpu_custom_call.1} parent=1 // pred_region
      %77 = dma.done [#allocation7], 16
    $region57: #{tpu_custom_call.1} parent=1 // pred_fallthru
      _
    %v79 = vld [vmem:[#allocation3] sm:$0xff]
    %v80 = vld [vmem:[#allocation3 + $0x8] sm:$0xff]
    %v81 = vld [vmem:[#allocation3 + $0x10] sm:$0xf]
    %v82 = vpack.c.bf16 %v80, %v79
    %v83 = vpack.c.bf16 %v81, %v81
    %v84 = vld [vmem:[%s1] sm:$0xff]
    %v85 = vld [vmem:[%s1 + $0x8] sm:$0xff]
    %v86 = vld [vmem:[%s1 + $0x10] sm:$0xff]
    %v87 = vld [vmem:[%s1 + $0x18] sm:$0xff]
    %v88 = vpack.c.bf16 %v85, %v84
    %v89 = vpack.c.bf16 %v87, %v86
    %v90 = vld [vmem:[#allocation6] sm:$0x1]
    %v92 = vlaneseq
    %v93 = vshrl.u32 %v92, 7
    %v94 = vsub.s32 0, %v93
    %v95 = vrot.slane %v90, %v94
    %vm97 = vcmask 261120
    %v99 = vsel %vm97, %v82, 0
    %v102 = vsel %vm97, %v83, 0
    %104 = vmatprep.subr.bf16.mxu0 0
    %105 = vmatpush1.bf16.msra.mxu0 %v88
    %106 = vmatprep.subr.bf16.mxu0 0
    %107 = vmatpush1.bf16.msra.mxu0 %v89
    %108 = vmatprep.subr.bf16.mxu0 0
    %109 = vmatpush1.bf16.msra.mxu0 0
    %110 = vmatprep.subr.bf16.mxu0 0
    %111 = vmatpush1.bf16.msra.mxu0 0
    %112 = vmatprep.subr.bf16.mxu0 0
    %113 = vmatpush1.bf16.msra.mxu0 0
    %114 = vmatprep.subr.bf16.mxu0 0
    %115 = vmatpush1.bf16.msra.mxu0 0
    %116 = vmatprep.subr.bf16.mxu0 0
    %117 = vmatpush1.bf16.msra.mxu0 0
    %118 = vmatprep.subr.bf16.mxu0 0
    %119 = vmatpush1.bf16.msra.mxu0 0
    %120 = vmatprep.subr.bf16.mxu0 0
    %121 = vmatpush1.bf16.msra.mxu0 0
    %122 = vmatprep.subr.bf16.mxu0 0
    %123 = vmatpush1.bf16.msra.mxu0 0
    %124 = vmatprep.subr.bf16.mxu0 0
    %125 = vmatpush1.bf16.msra.mxu0 0
    %126 = vmatprep.subr.bf16.mxu0 0
    %127 = vmatpush1.bf16.msra.mxu0 0
    %128 = vmatprep.subr.bf16.mxu0 0
    %129 = vmatpush1.bf16.msra.mxu0 0
    %130 = vmatprep.subr.bf16.mxu0 0
    %131 = vmatpush1.bf16.msra.mxu0 0
    %132 = vmatprep.subr.bf16.mxu0 0
    %133 = vmatpush1.bf16.msra.mxu0 0
    %134 = vmatprep.subr.bf16.mxu0 0
    %135 = vmatpush1.bf16.msra.mxu0 0
    %136 = vmatprep.mubr.bf16.mxu0 0
    %137 = vmatmul.mubr.bf16.gmra.mrb[0].mxu0 %v99
    %v138 = vpop.f32.mrb[0].mxu0
    %v139 = vadd.f32 %v95, %v138
    %v140 = vpop.f32.mrb[0].mxu0
    %v141 = vpop.f32.mrb[0].mxu0
    %v142 = vadd.f32 %v95, %v141
    %v143 = vpop.f32.mrb[0].mxu0
    %144 = vmatprep.mubr.bf16.mxu0 0
    %145 = vmatmul.mubr.bf16.gmra.mrb[0].mxu0 %v102
    %v146 = vpop.f32.mrb[0].mxu0
    %v147 = vadd.f32 %v95, %v146
    %v148 = vpop.f32.mrb[0].mxu0
    %v149 = vpop.f32.mrb[0].mxu0
    %v150 = vpop.f32.mrb[0].mxu0
    %151 = vdwg.mxu0
    %v152 = vtanh.pop %v139
    %v153 = vtanh.pop %v142
    %v154 = vtanh.pop %v147
    %v155 = vld [vmem:[%s3] sm:$0xff]
    %v156 = vld [vmem:[%s3 + $0x8] sm:$0xff]
    %v157 = vld [vmem:[%s3 + $0x10] sm:$0xff]
    %v158 = vld [vmem:[%s3 + $0x18] sm:$0xff]
    %v159 = vpack.c.bf16 %v156, %v155
    %v160 = vpack.c.bf16 %v158, %v157
    %v161 = vpack.c.bf16 %v153, %v152
    %v162 = vpack.c.bf16 %v154, %v154
    %v163 = vld [vmem:[#allocation8] sm:$0x1]
    %v165 = vlaneseq
    %v166 = vshrl.u32 %v165, 7
    %v167 = vsub.s32 0, %v166
    %v168 = vrot.slane %v163, %v167
    %v171 = vsel %vm97, %v161, 0
    %v174 = vsel %vm97, %v162, 0
    %176 = vmatprep.subr.bf16.mxu0 0
    %177 = vmatpush1.bf16.msra.mxu0 %v159
    %178 = vmatprep.subr.bf16.mxu0 0
    %179 = vmatpush1.bf16.msra.mxu0 %v160
    %180 = vmatprep.subr.bf16.mxu0 0
    %181 = vmatpush1.bf16.msra.mxu0 0
    %182 = vmatprep.subr.bf16.mxu0 0
    %183 = vmatpush1.bf16.msra.mxu0 0
    %184 = vmatprep.subr.bf16.mxu0 0
    %185 = vmatpush1.bf16.msra.mxu0 0
    %186 = vmatprep.subr.bf16.mxu0 0
    %187 = vmatpush1.bf16.msra.mxu0 0
    %188 = vmatprep.subr.bf16.mxu0 0
    %189 = vmatpush1.bf16.msra.mxu0 0
    %190 = vmatprep.subr.bf16.mxu0 0
    %191 = vmatpush1.bf16.msra.mxu0 0
    %192 = vmatprep.subr.bf16.mxu0 0
    %193 = vmatpush1.bf16.msra.mxu0 0
    %194 = vmatprep.subr.bf16.mxu0 0
    %195 = vmatpush1.bf16.msra.mxu0 0
    %196 = vmatprep.subr.bf16.mxu0 0
    %197 = vmatpush1.bf16.msra.mxu0 0
    %198 = vmatprep.subr.bf16.mxu0 0
    %199 = vmatpush1.bf16.msra.mxu0 0
    %200 = vmatprep.subr.bf16.mxu0 0
    %201 = vmatpush1.bf16.msra.mxu0 0
    %202 = vmatprep.subr.bf16.mxu0 0
    %203 = vmatpush1.bf16.msra.mxu0 0
    %204 = vmatprep.subr.bf16.mxu0 0
    %205 = vmatpush1.bf16.msra.mxu0 0
    %206 = vmatprep.subr.bf16.mxu0 0
    %207 = vmatpush1.bf16.msra.mxu0 0
    %208 = vmatprep.mubr.bf16.mxu0 0
    %209 = vmatmul.mubr.bf16.gmra.mrb[0].mxu0 %v171
    %v210 = vpop.f32.mrb[0].mxu0
    %v211 = vadd.f32 %v168, %v210
    %v212 = vpop.f32.mrb[0].mxu0
    %v213 = vpop.f32.mrb[0].mxu0
    %v214 = vadd.f32 %v168, %v213
    %v215 = vpop.f32.mrb[0].mxu0
    %216 = vmatprep.mubr.bf16.mxu0 0
    %217 = vmatmul.mubr.bf16.gmra.mrb[0].mxu0 %v174
    %v218 = vpop.f32.mrb[0].mxu0
    %v219 = vadd.f32 %v168, %v218
    %v220 = vpop.f32.mrb[0].mxu0
    %v221 = vpop.f32.mrb[0].mxu0
    %v222 = vpop.f32.mrb[0].mxu0
    %223 = vdwg.mxu0
    %vm224 = vcmask 64512
    %225 = vst.msk [vmem:[%s11] sm:$0xff] %vm224, %v211
    %226 = vst.msk [vmem:[%s11 + $0x8] sm:$0xff] %vm224, %v214
    %vm227 = vcmask 60416
    %228 = vst.msk [vmem:[%s11 + $0x10] sm:$0xf] %vm227, %v219
    %v229 = vld [vmem:[%s11 + $0x1] sm:$0xff]
    %230 = vst.msk [vmem:[#allocation2] sm:$0xff] %vm224, %v229
    %v231 = vld [vmem:[%s11 + $0xb] sm:$0xff]
    %s232 = scalar_lea.vmem [#allocation2], 8
    %233 = vst.msk [vmem:[%s232] sm:$0xff] %vm224, %v231
    %v234 = vld [vmem:[#allocation2] sm:$0xff]
    %v235 = vld [vmem:[#allocation2 + $0x8] sm:$0xff]
    %v236 = vld [vmem:[%s7] sm:$0x3]
    %v237 = vld [vmem:[%s8] sm:$0x1]
    %v238 = vld [vmem:[%s9] sm:$0x1]
    %v239 = vld [vmem:[%s10] sm:$0xff]
    %v240 = vld [vmem:[%s5] sm:$0xff]
    %v241 = vld [vmem:[%s5 + $0x8] sm:$0xff]
    %v242 = vmul.f32 %v234, %v240
    %v243 = vmul.f32 %v235, %v241
    %v244 = vsel %vm224, %v242, 0.0
    %245 = vadd.xlane.f32.xlu0 %v244
    %v246 = vpop.xlane.xlu0 %245
    %v247 = vsel %vm224, %v243, 0.0
    %248 = vadd.xlane.f32.xlu0 %v247
    %v249 = vpop.xlane.xlu0 %248
    %v252 = vlaneseq
    %v253 = vand.u32 %v252, 127
    %v254 = vlaneseq
    %v255 = vshrl.u32 %v254, 7
    %v256 = vsub.s32 %v253, %v255
    %v257 = vrot.slane %v246, %v256
    %v258 = vlaneseq
    %v259 = vshrl.u32 %v258, 7
    %v260 = vsub.s32 %v253, %v259
    %v261 = vrot.slane %v249, %v260
    %vm262 = vcmask 1041409
    %v263 = vsel %vm262, %v261, %v257
    %vm265 = vcmask 58368
    %v266 = vsel %vm265, %v263, 0.0
    %267 = vadd.xlane.f32.xlu0 %v266
    %v268 = vpop.xlane.xlu0 %267
    %v269 = vld [vmem:[%s6] sm:$0x3]
    %v270 = vadd.f32 %v269, %v268
    %v272 = vlaneseq
    %v273 = vshrl.u32 %v272, 7
    %v274 = vsub.s32 0, %v273
    %v275 = vrot.slane %v237, %v274
    %v279 = vrot.slane %v235, 7
    %v280 = vsel %vm262, %v279, %v234
    %v282 = vadd.f32 %v275, %v280
    %v283 = vlaneseq
    %v284 = vshrl.u32 %v283, 7
    %v285 = vsub.s32 0, %v284
    %v286 = vrot.slane %v282, %v285
    %288 = vbcast.lane.b32.xlu0 %v286, 256
    %v289 = vpop.permute.xlu0 %288
    %v290 = vlaneseq
    %v291 = vshrl.u32 %v290, 7
    %v292 = vsub.s32 1, %v291
    %v293 = vrot.slane %v282, %v292
    %295 = vbcast.lane.b32.xlu0 %v293, 256
    %v296 = vpop.permute.xlu0 %295
    %v297 = vadd.f32 %v289, %v239
    %v298 = vadd.f32 %v296, %v239
    %v299 = vlaneseq
    %v300 = vshrl.u32 %v299, 7
    %v301 = vsub.s32 1, %v300
    %v302 = vrot.slane %v234, %v301
    %v303 = vlaneseq
    %v304 = vshrl.u32 %v303, 7
    %v305 = vsub.s32 1, %v304
    %v306 = vrot.slane %v235, %v305
    %v307 = vadd.f32 %v297, %v302
    %v308 = vadd.f32 %v298, %v306
    %v309 = vsel %vm224, %v307, -inf
    %v310 = vrot.slane %v309, 4
    %v311 = vmax.f32 %v309, %v310
    %v312 = vrot.slane %v311, 2
    %v313 = vmax.f32 %v311, %v312
    %v314 = vrot.slane %v313, 1
    %v315 = vmax.f32 %v313, %v314
    %v316 = vsel %vm224, %v308, -inf
    %v317 = vrot.slane %v316, 4
    %v318 = vmax.f32 %v316, %v317
    %v319 = vrot.slane %v318, 2
    %v320 = vmax.f32 %v318, %v319
    %v321 = vrot.slane %v320, 1
    %v322 = vmax.f32 %v320, %v321
    %v323 = vsub.f32 %v307, %v315
    %v324 = vsub.f32 %v308, %v322
    %v325 = vmul.f32 %v323, 1.442695
    %v326 = vpow.pop %v325
    %v327 = vmul.f32 %v324, 1.442695
    %v328 = vpow.pop %v327
    %v329 = vsel %vm224, %v326, 0.0
    %v330 = vrot.slane %v329, 4
    %v331 = vadd.f32 %v329, %v330
    %v332 = vrot.slane %v331, 2
    %v333 = vadd.f32 %v331, %v332
    %v334 = vrot.slane %v333, 1
    %v335 = vadd.f32 %v333, %v334
    %v336 = vsel %vm224, %v328, 0.0
    %v337 = vrot.slane %v336, 4
    %v338 = vadd.f32 %v336, %v337
    %v339 = vrot.slane %v338, 2
    %v340 = vadd.f32 %v338, %v339
    %v341 = vrot.slane %v340, 1
    %v342 = vadd.f32 %v340, %v341
    %v343 = vlog2.pop %v335
    %v344 = vmul.f32 %v343, 0.6931472
    %v345 = vlog2.pop %v342
    %v346 = vmul.f32 %v345, 0.6931472
    %v347 = vadd.f32 %v344, %v315
    %v348 = vadd.f32 %v346, %v322
    %vm349 = vcmp.gt.f32.partialorder %v236, 0.0
    %v350 = vsel %vm349, 1, 0
    %351 = vset.pattern.permute.xlu0 1
    %352 = vperm.xlu0 %351, %v350
    %v353 = vpop.permute.xlu0 %352
    %vm354 = vcmp.eq.s32.totalorder %v353, 1
    %v357 = vsel %vm262, %v348, %v347
    %v359 = vsel %vm354, %v357, %v282
    %v360 = vlaneseq
    %v361 = vshrl.u32 %v360, 7
    %v362 = vsub.s32 0, %v361
    %v363 = vrot.slane %v359, %v362
    %365 = vbcast.lane.b32.xlu0 %v363, 256
    %v366 = vpop.permute.xlu0 %365
    %v367 = vlaneseq
    %v368 = vshrl.u32 %v367, 7
    %v369 = vsub.s32 1, %v368
    %v370 = vrot.slane %v359, %v369
    %372 = vbcast.lane.b32.xlu0 %v370, 256
    %v373 = vpop.permute.xlu0 %372
    %v374 = vadd.f32 %v366, %v239
    %v375 = vadd.f32 %v373, %v239
    %v376 = vlaneseq
    %v377 = vshrl.u32 %v376, 7
    %v378 = vsub.s32 2, %v377
    %v379 = vrot.slane %v234, %v378
    %v380 = vlaneseq
    %v381 = vshrl.u32 %v380, 7
    %v382 = vsub.s32 2, %v381
    %v383 = vrot.slane %v235, %v382
    %v384 = vadd.f32 %v374, %v379
    %v385 = vadd.f32 %v375, %v383
    %v386 = vsel %vm224, %v384, -inf
    %v387 = vrot.slane %v386, 4
    %v388 = vmax.f32 %v386, %v387
    %v389 = vrot.slane %v388, 2
    %v390 = vmax.f32 %v388, %v389
    %v391 = vrot.slane %v390, 1
    %v392 = vmax.f32 %v390, %v391
    %v393 = vsel %vm224, %v385, -inf
    %v394 = vrot.slane %v393, 4
    %v395 = vmax.f32 %v393, %v394
    %v396 = vrot.slane %v395, 2
    %v397 = vmax.f32 %v395, %v396
    %v398 = vrot.slane %v397, 1
    %v399 = vmax.f32 %v397, %v398
    %v400 = vsub.f32 %v384, %v392
    %v401 = vsub.f32 %v385, %v399
    %v402 = vmul.f32 %v400, 1.442695
    %v403 = vpow.pop %v402
    %v404 = vmul.f32 %v401, 1.442695
    %v405 = vpow.pop %v404
    %v406 = vsel %vm224, %v403, 0.0
    %v407 = vrot.slane %v406, 4
    %v408 = vadd.f32 %v406, %v407
    %v409 = vrot.slane %v408, 2
    %v410 = vadd.f32 %v408, %v409
    %v411 = vrot.slane %v410, 1
    %v412 = vadd.f32 %v410, %v411
    %v413 = vsel %vm224, %v405, 0.0
    %v414 = vrot.slane %v413, 4
    %v415 = vadd.f32 %v413, %v414
    %v416 = vrot.slane %v415, 2
    %v417 = vadd.f32 %v415, %v416
    %v418 = vrot.slane %v417, 1
    %v419 = vadd.f32 %v417, %v418
    %v420 = vlog2.pop %v412
    %v421 = vmul.f32 %v420, 0.6931472
    %v422 = vlog2.pop %v419
    %v423 = vmul.f32 %v422, 0.6931472
    %v424 = vadd.f32 %v421, %v392
    %v425 = vadd.f32 %v423, %v399
    %426 = vset.pattern.permute.xlu0 2
    %427 = vperm.xlu0 %426, %v350
    %v428 = vpop.permute.xlu0 %427
    %vm429 = vcmp.eq.s32.totalorder %v428, 1
    %v432 = vsel %vm262, %v425, %v424
    %v434 = vsel %vm429, %v432, %v359
    %v435 = vlaneseq
    %v436 = vshrl.u32 %v435, 7
    %v437 = vsub.s32 0, %v436
    %v438 = vrot.slane %v434, %v437
    %440 = vbcast.lane.b32.xlu0 %v438, 256
    %v441 = vpop.permute.xlu0 %440
    %v442 = vlaneseq
    %v443 = vshrl.u32 %v442, 7
    %v444 = vsub.s32 1, %v443
    %v445 = vrot.slane %v434, %v444
    %447 = vbcast.lane.b32.xlu0 %v445, 256
    %v448 = vpop.permute.xlu0 %447
    %v449 = vadd.f32 %v441, %v239
    %v450 = vadd.f32 %v448, %v239
    %v451 = vlaneseq
    %v452 = vshrl.u32 %v451, 7
    %v453 = vsub.s32 3, %v452
    %v454 = vrot.slane %v234, %v453
    %v455 = vlaneseq
    %v456 = vshrl.u32 %v455, 7
    %v457 = vsub.s32 3, %v456
    %v458 = vrot.slane %v235, %v457
    %v459 = vadd.f32 %v449, %v454
    %v460 = vadd.f32 %v450, %v458
    %v461 = vsel %vm224, %v459, -inf
    %v462 = vrot.slane %v461, 4
    %v463 = vmax.f32 %v461, %v462
    %v464 = vrot.slane %v463, 2
    %v465 = vmax.f32 %v463, %v464
    %v466 = vrot.slane %v465, 1
    %v467 = vmax.f32 %v465, %v466
    %v468 = vsel %vm224, %v460, -inf
    %v469 = vrot.slane %v468, 4
    %v470 = vmax.f32 %v468, %v469
    %v471 = vrot.slane %v470, 2
    %v472 = vmax.f32 %v470, %v471
    %v473 = vrot.slane %v472, 1
    %v474 = vmax.f32 %v472, %v473
    %v475 = vsub.f32 %v459, %v467
    %v476 = vsub.f32 %v460, %v474
    %v477 = vmul.f32 %v475, 1.442695
    %v478 = vpow.pop %v477
    %v479 = vmul.f32 %v476, 1.442695
    %v480 = vpow.pop %v479
    %v481 = vsel %vm224, %v478, 0.0
    %v482 = vrot.slane %v481, 4
    %v483 = vadd.f32 %v481, %v482
    %v484 = vrot.slane %v483, 2
    %v485 = vadd.f32 %v483, %v484
    %v486 = vrot.slane %v485, 1
    %v487 = vadd.f32 %v485, %v486
    %v488 = vsel %vm224, %v480, 0.0
    %v489 = vrot.slane %v488, 4
    %v490 = vadd.f32 %v488, %v489
    %v491 = vrot.slane %v490, 2
    %v492 = vadd.f32 %v490, %v491
    %v493 = vrot.slane %v492, 1
    %v494 = vadd.f32 %v492, %v493
    %v495 = vlog2.pop %v487
    %v496 = vmul.f32 %v495, 0.6931472
    %v497 = vlog2.pop %v494
    %v498 = vmul.f32 %v497, 0.6931472
    %v499 = vadd.f32 %v496, %v467
    %v500 = vadd.f32 %v498, %v474
    %501 = vset.pattern.permute.xlu0 3
    %502 = vperm.xlu0 %501, %v350
    %v503 = vpop.permute.xlu0 %502
    %vm504 = vcmp.eq.s32.totalorder %v503, 1
    %v507 = vsel %vm262, %v500, %v499
    %v509 = vsel %vm504, %v507, %v434
    %v510 = vlaneseq
    %v511 = vshrl.u32 %v510, 7
    %v512 = vsub.s32 0, %v511
    %v513 = vrot.slane %v509, %v512
    %515 = vbcast.lane.b32.xlu0 %v513, 256
    %v516 = vpop.permute.xlu0 %515
    %v517 = vlaneseq
    %v518 = vshrl.u32 %v517, 7
    %v519 = vsub.s32 1, %v518
    %v520 = vrot.slane %v509, %v519
    %522 = vbcast.lane.b32.xlu0 %v520, 256
    %v523 = vpop.permute.xlu0 %522
    %v524 = vadd.f32 %v516, %v239
    %v525 = vadd.f32 %v523, %v239
    %v526 = vlaneseq
    %v527 = vshrl.u32 %v526, 7
    %v528 = vsub.s32 4, %v527
    %v529 = vrot.slane %v234, %v528
    %v530 = vlaneseq
    %v531 = vshrl.u32 %v530, 7
    %v532 = vsub.s32 4, %v531
    %v533 = vrot.slane %v235, %v532
    %v534 = vadd.f32 %v524, %v529
    %v535 = vadd.f32 %v525, %v533
    %v536 = vsel %vm224, %v534, -inf
    %v537 = vrot.slane %v536, 4
    %v538 = vmax.f32 %v536, %v537
    %v539 = vrot.slane %v538, 2
    %v540 = vmax.f32 %v538, %v539
    %v541 = vrot.slane %v540, 1
    %v542 = vmax.f32 %v540, %v541
    %v543 = vsel %vm224, %v535, -inf
    %v544 = vrot.slane %v543, 4
    %v545 = vmax.f32 %v543, %v544
    %v546 = vrot.slane %v545, 2
    %v547 = vmax.f32 %v545, %v546
    %v548 = vrot.slane %v547, 1
    %v549 = vmax.f32 %v547, %v548
    %v550 = vsub.f32 %v534, %v542
    %v551 = vsub.f32 %v535, %v549
    %v552 = vmul.f32 %v550, 1.442695
    %v553 = vpow.pop %v552
    %v554 = vmul.f32 %v551, 1.442695
    %v555 = vpow.pop %v554
    %v556 = vsel %vm224, %v553, 0.0
    %v557 = vrot.slane %v556, 4
    %v558 = vadd.f32 %v556, %v557
    %v559 = vrot.slane %v558, 2
    %v560 = vadd.f32 %v558, %v559
    %v561 = vrot.slane %v560, 1
    %v562 = vadd.f32 %v560, %v561
    %v563 = vsel %vm224, %v555, 0.0
    %v564 = vrot.slane %v563, 4
    %v565 = vadd.f32 %v563, %v564
    %v566 = vrot.slane %v565, 2
    %v567 = vadd.f32 %v565, %v566
    %v568 = vrot.slane %v567, 1
    %v569 = vadd.f32 %v567, %v568
    %v570 = vlog2.pop %v562
    %v571 = vmul.f32 %v570, 0.6931472
    %v572 = vlog2.pop %v569
    %v573 = vmul.f32 %v572, 0.6931472
    %v574 = vadd.f32 %v571, %v542
    %v575 = vadd.f32 %v573, %v549
    %576 = vset.pattern.permute.xlu0 4
    %577 = vperm.xlu0 %576, %v350
    %v578 = vpop.permute.xlu0 %577
    %vm579 = vcmp.eq.s32.totalorder %v578, 1
    %v582 = vsel %vm262, %v575, %v574
    %v584 = vsel %vm579, %v582, %v509
    %v585 = vlaneseq
    %v586 = vshrl.u32 %v585, 7
    %v587 = vsub.s32 0, %v586
    %v588 = vrot.slane %v584, %v587
    %590 = vbcast.lane.b32.xlu0 %v588, 256
    %v591 = vpop.permute.xlu0 %590
    %v592 = vlaneseq
    %v593 = vshrl.u32 %v592, 7
    %v594 = vsub.s32 1, %v593
    %v595 = vrot.slane %v584, %v594
    %597 = vbcast.lane.b32.xlu0 %v595, 256
    %v598 = vpop.permute.xlu0 %597
    %v599 = vadd.f32 %v591, %v239
    %v600 = vadd.f32 %v598, %v239
    %v601 = vlaneseq
    %v602 = vshrl.u32 %v601, 7
    %v603 = vsub.s32 5, %v602
    %v604 = vrot.slane %v234, %v603
    %v605 = vlaneseq
    %v606 = vshrl.u32 %v605, 7
    %v607 = vsub.s32 5, %v606
    %v608 = vrot.slane %v235, %v607
    %v609 = vadd.f32 %v599, %v604
    %v610 = vadd.f32 %v600, %v608
    %v611 = vsel %vm224, %v609, -inf
    %v612 = vrot.slane %v611, 4
    %v613 = vmax.f32 %v611, %v612
    %v614 = vrot.slane %v613, 2
    %v615 = vmax.f32 %v613, %v614
    %v616 = vrot.slane %v615, 1
    %v617 = vmax.f32 %v615, %v616
    %v618 = vsel %vm224, %v610, -inf
    %v619 = vrot.slane %v618, 4
    %v620 = vmax.f32 %v618, %v619
    %v621 = vrot.slane %v620, 2
    %v622 = vmax.f32 %v620, %v621
    %v623 = vrot.slane %v622, 1
    %v624 = vmax.f32 %v622, %v623
    %v625 = vsub.f32 %v609, %v617
    %v626 = vsub.f32 %v610, %v624
    %v627 = vmul.f32 %v625, 1.442695
    %v628 = vpow.pop %v627
    %v629 = vmul.f32 %v626, 1.442695
    %v630 = vpow.pop %v629
    %v631 = vsel %vm224, %v628, 0.0
    %v632 = vrot.slane %v631, 4
    %v633 = vadd.f32 %v631, %v632
    %v634 = vrot.slane %v633, 2
    %v635 = vadd.f32 %v633, %v634
    %v636 = vrot.slane %v635, 1
    %v637 = vadd.f32 %v635, %v636
    %v638 = vsel %vm224, %v630, 0.0
    %v639 = vrot.slane %v638, 4
    %v640 = vadd.f32 %v638, %v639
    %v641 = vrot.slane %v640, 2
    %v642 = vadd.f32 %v640, %v641
    %v643 = vrot.slane %v642, 1
    %v644 = vadd.f32 %v642, %v643
    %v645 = vlog2.pop %v637
    %v646 = vmul.f32 %v645, 0.6931472
    %v647 = vlog2.pop %v644
    %v648 = vmul.f32 %v647, 0.6931472
    %v649 = vadd.f32 %v646, %v617
    %v650 = vadd.f32 %v648, %v624
    %651 = vset.pattern.permute.xlu0 5
    %652 = vperm.xlu0 %651, %v350
    %v653 = vpop.permute.xlu0 %652
    %vm654 = vcmp.eq.s32.totalorder %v653, 1
    %v657 = vsel %vm262, %v650, %v649
    %v659 = vsel %vm654, %v657, %v584
    %v660 = vlaneseq
    %v661 = vshrl.u32 %v660, 7
    %v662 = vsub.s32 0, %v661
    %v663 = vrot.slane %v659, %v662
    %665 = vbcast.lane.b32.xlu0 %v663, 256
    %v666 = vpop.permute.xlu0 %665
    %v667 = vlaneseq
    %v668 = vshrl.u32 %v667, 7
    %v669 = vsub.s32 1, %v668
    %v670 = vrot.slane %v659, %v669
    %672 = vbcast.lane.b32.xlu0 %v670, 256
    %v673 = vpop.permute.xlu0 %672
    %v674 = vadd.f32 %v666, %v239
    %v675 = vadd.f32 %v673, %v239
    %v676 = vlaneseq
    %v677 = vshrl.u32 %v676, 7
    %v678 = vsub.s32 6, %v677
    %v679 = vrot.slane %v234, %v678
    %v680 = vlaneseq
    %v681 = vshrl.u32 %v680, 7
    %v682 = vsub.s32 6, %v681
    %v683 = vrot.slane %v235, %v682
    %v684 = vadd.f32 %v674, %v679
    %v685 = vadd.f32 %v675, %v683
    %v686 = vsel %vm224, %v684, -inf
    %v687 = vrot.slane %v686, 4
    %v688 = vmax.f32 %v686, %v687
    %v689 = vrot.slane %v688, 2
    %v690 = vmax.f32 %v688, %v689
    %v691 = vrot.slane %v690, 1
    %v692 = vmax.f32 %v690, %v691
    %v693 = vsel %vm224, %v685, -inf
    %v694 = vrot.slane %v693, 4
    %v695 = vmax.f32 %v693, %v694
    %v696 = vrot.slane %v695, 2
    %v697 = vmax.f32 %v695, %v696
    %v698 = vrot.slane %v697, 1
    %v699 = vmax.f32 %v697, %v698
    %v700 = vsub.f32 %v684, %v692
    %v701 = vsub.f32 %v685, %v699
    %v702 = vmul.f32 %v700, 1.442695
    %v703 = vpow.pop %v702
    %v704 = vmul.f32 %v701, 1.442695
    %v705 = vpow.pop %v704
    %v706 = vsel %vm224, %v703, 0.0
    %v707 = vrot.slane %v706, 4
    %v708 = vadd.f32 %v706, %v707
    %v709 = vrot.slane %v708, 2
    %v710 = vadd.f32 %v708, %v709
    %v711 = vrot.slane %v710, 1
    %v712 = vadd.f32 %v710, %v711
    %v713 = vsel %vm224, %v705, 0.0
    %v714 = vrot.slane %v713, 4
    %v715 = vadd.f32 %v713, %v714
    %v716 = vrot.slane %v715, 2
    %v717 = vadd.f32 %v715, %v716
    %v718 = vrot.slane %v717, 1
    %v719 = vadd.f32 %v717, %v718
    %v720 = vlog2.pop %v712
    %v721 = vmul.f32 %v720, 0.6931472
    %v722 = vlog2.pop %v719
    %v723 = vmul.f32 %v722, 0.6931472
    %v724 = vadd.f32 %v721, %v692
    %v725 = vadd.f32 %v723, %v699
    %726 = vset.pattern.permute.xlu0 6
    %727 = vperm.xlu0 %726, %v350
    %v728 = vpop.permute.xlu0 %727
    %vm729 = vcmp.eq.s32.totalorder %v728, 1
    %v732 = vsel %vm262, %v725, %v724
    %v734 = vsel %vm729, %v732, %v659
    %v735 = vlaneseq
    %v736 = vshrl.u32 %v735, 7
    %v737 = vsub.s32 0, %v736
    %v738 = vrot.slane %v734, %v737
    %740 = vbcast.lane.b32.xlu0 %v738, 256
    %v741 = vpop.permute.xlu0 %740
    %v742 = vlaneseq
    %v743 = vshrl.u32 %v742, 7
    %v744 = vsub.s32 1, %v743
    %v745 = vrot.slane %v734, %v744
    %747 = vbcast.lane.b32.xlu0 %v745, 256
    %v748 = vpop.permute.xlu0 %747
    %v749 = vadd.f32 %v741, %v239
    %v750 = vadd.f32 %v748, %v239
    %v751 = vlaneseq
    %v752 = vshrl.u32 %v751, 7
    %v753 = vsub.s32 7, %v752
    %v754 = vrot.slane %v234, %v753
    %v755 = vlaneseq
    %v756 = vshrl.u32 %v755, 7
    %v757 = vsub.s32 7, %v756
    %v758 = vrot.slane %v235, %v757
    %v759 = vadd.f32 %v749, %v754
    %v760 = vadd.f32 %v750, %v758
    %v761 = vsel %vm224, %v759, -inf
    %v762 = vrot.slane %v761, 4
    %v763 = vmax.f32 %v761, %v762
    %v764 = vrot.slane %v763, 2
    %v765 = vmax.f32 %v763, %v764
    %v766 = vrot.slane %v765, 1
    %v767 = vmax.f32 %v765, %v766
    %v768 = vsel %vm224, %v760, -inf
    %v769 = vrot.slane %v768, 4
    %v770 = vmax.f32 %v768, %v769
    %v771 = vrot.slane %v770, 2
    %v772 = vmax.f32 %v770, %v771
    %v773 = vrot.slane %v772, 1
    %v774 = vmax.f32 %v772, %v773
    %v775 = vsub.f32 %v759, %v767
    %v776 = vsub.f32 %v760, %v774
    %v777 = vmul.f32 %v775, 1.442695
    %v778 = vpow.pop %v777
    %v779 = vmul.f32 %v776, 1.442695
    %v780 = vpow.pop %v779
    %v781 = vsel %vm224, %v778, 0.0
    %v782 = vrot.slane %v781, 4
    %v783 = vadd.f32 %v781, %v782
    %v784 = vrot.slane %v783, 2
    %v785 = vadd.f32 %v783, %v784
    %v786 = vrot.slane %v785, 1
    %v787 = vadd.f32 %v785, %v786
    %v788 = vsel %vm224, %v780, 0.0
    %v789 = vrot.slane %v788, 4
    %v790 = vadd.f32 %v788, %v789
    %v791 = vrot.slane %v790, 2
    %v792 = vadd.f32 %v790, %v791
    %v793 = vrot.slane %v792, 1
    %v794 = vadd.f32 %v792, %v793
    %v795 = vlog2.pop %v787
    %v796 = vmul.f32 %v795, 0.6931472
    %v797 = vlog2.pop %v794
    %v798 = vmul.f32 %v797, 0.6931472
    %v799 = vadd.f32 %v796, %v767
    %v800 = vadd.f32 %v798, %v774
    %801 = vset.pattern.permute.xlu0 7
    %802 = vperm.xlu0 %801, %v350
    %v803 = vpop.permute.xlu0 %802
    %vm804 = vcmp.eq.s32.totalorder %v803, 1
    %v807 = vsel %vm262, %v800, %v799
    %v809 = vsel %vm804, %v807, %v734
    %v811 = vlaneseq
    %v812 = vshrl.u32 %v811, 7
    %v813 = vsub.s32 0, %v812
    %v814 = vrot.slane %v238, %v813
    %v816 = vadd.f32 %v809, %v814
    %v817 = vsel %vm265, %v816, -inf
    %818 = vmax.xlane.f32.xlu0 %v817
    %v819 = vpop.xlane.xlu0 %818
    %v820 = vsub.f32 %v816, %v819
    %v821 = vmul.f32 %v820, 1.442695
    %v822 = vpow.pop %v821
    %v823 = vsel %vm265, %v822, 0.0
    %824 = vadd.xlane.f32.xlu0 %v823
    %v825 = vpop.xlane.xlu0 %824
    %v826 = vlog2.pop %v825
    %v827 = vmul.f32 %v826, 0.6931472
    %v828 = vadd.f32 %v827, %v819
    %v829 = vsub.f32 %v270, %v828
    %vm830 = vcmask 1024
    %v831 = vsel %vm830, %v829, 0.0
    %v832 = vrot.slane %v831, 4
    %v833 = vadd.f32 %v831, %v832
    %v834 = vrot.slane %v833, 2
    %v835 = vadd.f32 %v833, %v834
    %v836 = vrot.slane %v835, 1
    %v837 = vadd.f32 %v835, %v836
    %v838 = vrcp.pop 2.0
    %v839 = vmul.f32 %v837, %v838
    %vm840 = vcmask 0
    %841 = vst.msk [vmem:[#allocation9] sm:$0x1] %vm840, %v839
    // Predicated region
    $region58: #{tpu_custom_call.1} parent=1 // pred_check
      _
    $region59: #{tpu_custom_call.1} parent=1 // pred_check_branch
      %843 = sbr.rel (0) target = $region61
    $region60: #{tpu_custom_call.1} parent=1 // pred_region
      _
    $region61: #{tpu_custom_call.1} parent=1 // pred_fallthru
      _
    // Predicated region
    $region62: #{tpu_custom_call.1} parent=1 // pred_check
      _
    $region63: #{tpu_custom_call.1} parent=1 // pred_check_branch
      %845 = sbr.rel (0) target = $region65
    $region64: #{tpu_custom_call.1} parent=1 // pred_region
      %s847 = ssub.s32 16, 16
      %848 = vsyncadd [#allocation5], %s847
      %s850 = sshll.u32 [#allocation9], 4
      %s851 = int_to_ptr.vmem [resolvable:$true] %s850
      %853 = dma.vmem_to_hbm [thread:$0]  %s851, 16, %s12, [#allocation5]
    $region65: #{tpu_custom_call.1} parent=1 // pred_fallthru
      _
    // Predicated region
    $region66: #{tpu_custom_call.1} parent=1 // pred_check
      _
    $region67: #{tpu_custom_call.1} parent=1 // pred_check_branch
      %855 = sbr.rel (0) target = $region69
    $region68: #{tpu_custom_call.1} parent=1 // pred_region
      _
    $region69: #{tpu_custom_call.1} parent=1 // pred_fallthru
      _
    // Predicated region
    $region70: #{tpu_custom_call.1} parent=1 // pred_check
      _
    $region71: #{tpu_custom_call.1} parent=1 // pred_check_branch
      %857 = sbr.rel (0) target = $region73
    $region72: #{tpu_custom_call.1} parent=1 // pred_region
      %858 = dma.done [#allocation5], 16
    $region73: #{tpu_custom_call.1} parent=1 // pred_fallthru
      _
    %859 = vsyncpa [#allocation4], 1
    %860 = vsyncpa [#allocation7], 1
    %861 = vsyncpa [#allocation5], 1

</llo_original>
